<compile_context>
chip_gen: v5e
topology: v5e:2x2
jax: 0.10.0
libtpu: 0.0.40
codegen_flags: <defaults>
</compile_context>

<pallas_src>
import jax
import jax.numpy as jnp
from jax.experimental import pallas as pl
from jax.experimental.pallas import tpu as pltpu


def _round_up(x, m):
    return ((x + m - 1) // m) * m


def _cdiv(a, b):
    return -(-a // b)


# ---------------------------------------------------------------------------
# Pallas kernel: fused (multi-hot embedding matmul -> ReLU -> Linear -> ReLU)
# ---------------------------------------------------------------------------
def item_tower_kernel(idx_ref, w1_ref, w2_ref, b2_ref, o_ref):
    # idx_ref : [TM, 4] int32, per-field row offsets already added in wrapper
    # w1_ref  : [K_pad, H1] bf16, folded (tables @ W1-slices), b1 folded in,
    #           padded rows are zero and never selected
    # w2_ref  : [H1, H2] bf16
    # b2_ref  : [1, H2]  f32
    idx = idx_ref[...]
    tm = idx.shape[0]
    k = w1_ref.shape[0]

    # Single shared iota + 4 compares -> one multi-hot in the MXU input dtype.
    col = jax.lax.broadcasted_iota(jnp.int32, (tm, k), 1)
    mh = ((idx[:, 0:1] == col) | (idx[:, 1:2] == col)
          | (idx[:, 2:3] == col) | (idx[:, 3:4] == col)).astype(jnp.bfloat16)

    # Layer 1: one bf16 MXU push, f32 accumulation.  b1 already folded in.
    h = jnp.dot(mh, w1_ref[...], preferred_element_type=jnp.float32)
    h = jnp.maximum(h, 0.0).astype(jnp.bfloat16)              # ReLU, bf16 for MXU

    # Layer 2.
    o = jnp.dot(h, w2_ref[...], preferred_element_type=jnp.float32) + b2_ref[...]
    o_ref[...] = jnp.maximum(o, 0.0).astype(o_ref.dtype)      # ReLU


# ---------------------------------------------------------------------------
# Wrapper: fold tables+b1 into one W1cat, stack indices, tile the batch
# ---------------------------------------------------------------------------
def item_tower_forward(params, item_id, genre, year, context, *, tm_max=2048):
    B = item_id.shape[0]
    HIGH = jax.lax.Precision.HIGHEST

    tables = [params["item_id_emb"], params["genre_emb"],
              params["year_emb"], params["context_emb"]]
    sizes = [t.shape[0] for t in tables]
    dims = [t.shape[1] for t in tables]
    w1, b1, w2, b2 = params["w1"], params["b1"], params["w2"], params["b2"]
    H2 = w2.shape[1]

    # Fold each table into its W1 row-slice (exact re-association in f32).
    row_off = [0]
    for d in dims:
        row_off.append(row_off[-1] + d)
    folded = [jnp.matmul(t, w1[row_off[f]:row_off[f + 1]], precision=HIGH)
              for f, t in enumerate(tables)]
    # Fold b1 into the last field: every row selects exactly one context row,
    # so the bias is added exactly once.
    folded[-1] = folded[-1] + b1

    w1cat = jnp.concatenate(folded, axis=0)                   # [K_total, H1]
    K_total = w1cat.shape[0]
    K_pad = _round_up(K_total, 8)
    w1cat = jnp.pad(w1cat, ((0, K_pad - K_total), (0, 0))).astype(jnp.bfloat16)
    w2_bf = w2.astype(jnp.bfloat16)

    # Per-field column offsets inside the concatenated table.
    offs, acc = [], 0
    for n in sizes:
        offs.append(acc)
        acc += n
    offsets = jnp.asarray(offs, dtype=jnp.int32)              # [4]

    # Batch tiling: multiple of 8, capped by tm_max, and >= 2 tiles for large
    # batches so ("parallel",) can shard across both v7x TensorCores.
    TM = min(tm_max, max(8, _round_up(_cdiv(B, 2), 8)))
    B_pad = _round_up(B, TM)

    # Single stacked [B_pad, 4] int32 index input (padded rows -> field row 0).
    idx = jnp.stack([item_id, genre, year, context], axis=-1).astype(jnp.int32)
    idx = jnp.pad(idx, ((0, B_pad - B), (0, 0)))
    idx = idx + offsets[None, :]

    # Weights/biases: full-array blocks, constant index_map -> VMEM-resident
    # across all batch tiles.  TODO(synk): at production vocab sizes add
    # pipeline_mode=pl.Buffered(1) here + per-generation vmem_limit_bytes.
    full = lambda a: pl.BlockSpec(a.shape, lambda i: (0,) * a.ndim)

    out = pl.pallas_call(
        item_tower_kernel,
        out_shape=jax.ShapeDtypeStruct((B_pad, H2), jnp.float32),
        grid=(B_pad // TM,),
        in_specs=[pl.BlockSpec((TM, 4), lambda i: (i, 0)),
                  full(w1cat), full(w2_bf), full(b2)],
        out_specs=pl.BlockSpec((TM, H2), lambda i: (i, 0)),
        compiler_params=pltpu.CompilerParams(
            dimension_semantics=("parallel",),      # megacore on v7x
            vmem_limit_bytes=32 * 1024 * 1024,      # safe on 64 MiB v7x
        ),
    )(idx, w1cat, w2_bf, b2)

    return out[:B]


# ---------------------------------------------------------------------------
# Pure-JAX reference (mirrors the PyTorch forward exactly, f32)
# ---------------------------------------------------------------------------
def item_tower_reference(params, item_id, genre, year, context):
    HIGH = jax.lax.Precision.HIGHEST
    x = jnp.concatenate(
        [
            params["item_id_emb"][item_id],
            params["genre_emb"][genre],
            params["year_emb"][year],
            params["context_emb"][context],
        ],
        axis=-1,
    )
    h = jnp.maximum(jnp.matmul(x, params["w1"], precision=HIGH) + params["b1"], 0.0)
    o = jnp.maximum(jnp.matmul(h, params["w2"], precision=HIGH) + params["b2"], 0.0)
    return o


# ---------------------------------------------------------------------------
# Deterministic parameter init (mirrors the PyTorch module's shapes)
# ---------------------------------------------------------------------------
def init_params(key, num_items, num_genres, num_years, num_contexts,
                embed_dim=32, hidden_dims=(128, 64)):
    d_in = embed_dim + 8 + 4 + 8
    ks = jax.random.split(key, 8)

    def linear_init(kw, kb, fan_in, fan_out):
        # PyTorch nn.Linear default: U(-1/sqrt(fan_in), 1/sqrt(fan_in))
        bound = 1.0 / jnp.sqrt(fan_in)
        w = jax.random.uniform(kw, (fan_in, fan_out), jnp.float32, -bound, bound)
        b = jax.random.uniform(kb, (1, fan_out), jnp.float32, -bound, bound)
        return w, b

    w1, b1 = linear_init(ks[4], ks[5], d_in, hidden_dims[0])
    w2, b2 = linear_init(ks[6], ks[7], hidden_dims[0], hidden_dims[1])

    return {
        # nn.Embedding default init: N(0, 1)
        "item_id_emb": jax.random.normal(ks[0], (num_items, embed_dim), jnp.float32),
        "genre_emb": jax.random.normal(ks[1], (num_genres, 8), jnp.float32),
        "year_emb": jax.random.normal(ks[2], (num_years, 4), jnp.float32),
        "context_emb": jax.random.normal(ks[3], (num_contexts, 8), jnp.float32),
        "w1": w1, "b1": b1,
        "w2": w2, "b2": b2,
    }


if __name__ == "__main__":
    num_items, num_genres, num_years, num_contexts = 50, 10, 6, 4
    params = init_params(jax.random.PRNGKey(0),
                         num_items, num_genres, num_years, num_contexts)

    def make_batch(seed, batch):
        k1, k2, k3, k4 = jax.random.split(jax.random.PRNGKey(seed), 4)
        return (jax.random.randint(k1, (batch,), 0, num_items),
                jax.random.randint(k2, (batch,), 0, num_genres),
                jax.random.randint(k3, (batch,), 0, num_years),
                jax.random.randint(k4, (batch,), 0, num_contexts))

    # Tolerances absorb bf16 MXU operands (weights / hidden); multi-hot is exact.
    ATOL = RTOL = 1e-2

    # Small demo batch (single tile, grid=(1,)).
    item_id, genre, year, context = make_batch(0, 8)
    out_small = item_tower_forward(params, item_id, genre, year, context)
    out_small = jax.block_until_ready(out_small)
    ref_small = item_tower_reference(params, item_id, genre, year, context)
    assert out_small.shape == (8, 64), out_small.shape
    assert jnp.allclose(out_small, ref_small, atol=ATOL, rtol=RTOL)

    # Larger batch: exercises >=2 grid steps (TM = round_up(ceil(B/2), 8)) and
    # tail padding masked out by the wrapper slice.
    item_id2, genre2, year2, context2 = make_batch(1, 1000)
    out_big = item_tower_forward(params, item_id2, genre2, year2, context2)
    out_big = jax.block_until_ready(out_big)
    ref_big = item_tower_reference(params, item_id2, genre2, year2, context2)
    assert out_big.shape == (1000, 64), out_big.shape
    assert jnp.allclose(out_big, ref_big, atol=ATOL, rtol=RTOL)

    print("KERNEL_OK")
</pallas_src>

<mosaic_0001>
module attributes {stable_mosaic.version = 11 : i64} {
  func.func @item_tower_kernel(%arg0: i32, %arg1: memref<8x4xi32, #tpu.memory_space<vmem>>, %arg2: memref<72x128xbf16, #tpu.memory_space<vmem>>, %arg3: memref<128x64xbf16, #tpu.memory_space<vmem>>, %arg4: memref<1x64xf32, #tpu.memory_space<vmem>>, %arg5: memref<8x64xf32, #tpu.memory_space<vmem>>) attributes {dimension_semantics = [#tpu.dimension_semantics<parallel>], iteration_bounds = array<i64: 1>, scalar_prefetch = 0 : i64, scratch_operands = 0 : i64, tpu.core_type = #tpu.core_type<tc>, window_params = [{transform_indices = @transform_0, window_bounds = array<i64: 8, 4>}, {pipeline_mode = #tpu.pipeline_mode<synchronous>, transform_indices = @transform_1, window_bounds = array<i64: 72, 128>}, {pipeline_mode = #tpu.pipeline_mode<synchronous>, transform_indices = @transform_2, window_bounds = array<i64: 128, 64>}, {pipeline_mode = #tpu.pipeline_mode<synchronous>, transform_indices = @transform_3, window_bounds = array<i64: 1, 64>}, {transform_indices = @transform_4, window_bounds = array<i64: 8, 64>}]} {
    %c0 = arith.constant 0 : index
    %c0_0 = arith.constant 0 : index
    %0 = vector.load %arg1[%c0, %c0_0] : memref<8x4xi32, #tpu.memory_space<vmem>>, vector<8x4xi32>
    %1 = tpu.iota {dimensions = array<i32: 1>} : vector<8x72xi32>
    %2 = vector.extract_strided_slice %0 {offsets = [0, 0], sizes = [8, 1], strides = [1, 1]} : vector<8x4xi32> to vector<8x1xi32>
    %3 = vector.broadcast %2 : vector<8x1xi32> to vector<8x72xi32>
    %4 = arith.cmpi eq, %3, %1 : vector<8x72xi32>
    %5 = vector.extract_strided_slice %0 {offsets = [0, 1], sizes = [8, 1], strides = [1, 1]} : vector<8x4xi32> to vector<8x1xi32>
    %6 = vector.broadcast %5 : vector<8x1xi32> to vector<8x72xi32>
    %7 = arith.cmpi eq, %6, %1 : vector<8x72xi32>
    %8 = arith.ori %4, %7 : vector<8x72xi1>
    %9 = vector.extract_strided_slice %0 {offsets = [0, 2], sizes = [8, 1], strides = [1, 1]} : vector<8x4xi32> to vector<8x1xi32>
    %10 = vector.broadcast %9 : vector<8x1xi32> to vector<8x72xi32>
    %11 = arith.cmpi eq, %10, %1 : vector<8x72xi32>
    %12 = arith.ori %8, %11 : vector<8x72xi1>
    %13 = vector.extract_strided_slice %0 {offsets = [0, 3], sizes = [8, 1], strides = [1, 1]} : vector<8x4xi32> to vector<8x1xi32>
    %14 = vector.broadcast %13 : vector<8x1xi32> to vector<8x72xi32>
    %15 = arith.cmpi eq, %14, %1 : vector<8x72xi32>
    %16 = arith.ori %12, %15 : vector<8x72xi1>
    %17 = arith.extui %16 : vector<8x72xi1> to vector<8x72xi32>
    %18 = arith.sitofp %17 : vector<8x72xi32> to vector<8x72xf32>
    %19 = arith.truncf %18 : vector<8x72xf32> to vector<8x72xbf16>
    %c0_1 = arith.constant 0 : index
    %c0_2 = arith.constant 0 : index
    %20 = vector.load %arg2[%c0_1, %c0_2] : memref<72x128xbf16, #tpu.memory_space<vmem>>, vector<72x128xbf16>
    %cst = arith.constant dense<0.000000e+00> : vector<8x128xf32>
    %21 = tpu.matmul %19, %20, %cst {dimension_numbers = #tpu.dot_dimension_numbers<[1], [0], [0], [1], [0, 0, 1, 1], [], []>} : vector<8x72xbf16>, vector<72x128xbf16>, vector<8x128xf32> -> vector<8x128xf32>
    %cst_3 = arith.constant 0.000000e+00 : f32
    %22 = vector.broadcast %cst_3 : f32 to vector<8x128xf32>
    %23 = arith.maximumf %21, %22 : vector<8x128xf32>
    %24 = arith.truncf %23 : vector<8x128xf32> to vector<8x128xbf16>
    %c0_4 = arith.constant 0 : index
    %c0_5 = arith.constant 0 : index
    %25 = vector.load %arg3[%c0_4, %c0_5] : memref<128x64xbf16, #tpu.memory_space<vmem>>, vector<128x64xbf16>
    %cst_6 = arith.constant dense<0.000000e+00> : vector<8x64xf32>
    %26 = tpu.matmul %24, %25, %cst_6 {dimension_numbers = #tpu.dot_dimension_numbers<[1], [0], [0], [1], [0, 0, 1, 1], [], []>} : vector<8x128xbf16>, vector<128x64xbf16>, vector<8x64xf32> -> vector<8x64xf32>
    %c0_7 = arith.constant 0 : index
    %c0_8 = arith.constant 0 : index
    %27 = vector.load %arg4[%c0_7, %c0_8] : memref<1x64xf32, #tpu.memory_space<vmem>>, vector<1x64xf32>
    %28 = vector.broadcast %27 : vector<1x64xf32> to vector<8x64xf32>
    %29 = arith.addf %26, %28 : vector<8x64xf32>
    %cst_9 = arith.constant 0.000000e+00 : f32
    %30 = vector.broadcast %cst_9 : f32 to vector<8x64xf32>
    %31 = arith.maximumf %29, %30 : vector<8x64xf32>
    %c0_10 = arith.constant 0 : index
    %c0_11 = arith.constant 0 : index
    %32 = vector.load %arg5[%c0_10, %c0_11] : memref<8x64xf32, #tpu.memory_space<vmem>>, vector<8x64xf32>
    tpu.vector_store %arg5[%c0_10, %c0_11], %31 {strides = array<i32>} : memref<8x64xf32, #tpu.memory_space<vmem>>, vector<8x64xf32>,
    return
  }
  func.func @transform_0(%arg0: i32) -> (i32, i32) {
    %c0_i32 = arith.constant 0 : i32
    %c0_i32_0 = arith.constant 0 : i32
    return %arg0, %c0_i32 : i32, i32
  }
  func.func @transform_1(%arg0: i32) -> (i32, i32) {
    %c0_i32 = arith.constant 0 : i32
    %c0_i32_0 = arith.constant 0 : i32
    %c0_i32_1 = arith.constant 0 : i32
    return %c0_i32, %c0_i32_0 : i32, i32
  }
  func.func @transform_2(%arg0: i32) -> (i32, i32) {
    %c0_i32 = arith.constant 0 : i32
    %c0_i32_0 = arith.constant 0 : i32
    %c0_i32_1 = arith.constant 0 : i32
    return %c0_i32, %c0_i32_0 : i32, i32
  }
  func.func @transform_3(%arg0: i32) -> (i32, i32) {
    %c0_i32 = arith.constant 0 : i32
    %c0_i32_0 = arith.constant 0 : i32
    %c0_i32_1 = arith.constant 0 : i32
    return %c0_i32, %c0_i32_0 : i32, i32
  }
  func.func @transform_4(%arg0: i32) -> (i32, i32) {
    %c0_i32 = arith.constant 0 : i32
    %c0_i32_0 = arith.constant 0 : i32
    return %arg0, %c0_i32 : i32, i32
  }
}

</mosaic_0001>

<llo_original>
// kernel: tpu_custom_call.1
$region0: #{tpu_custom_call.1}
  #allocation0 [shape = 'u32[]', space=smem, size = 0x4, offset = 0x4, fixed_abs, tag = 'smem constant byte address 0x4 - core index']
  #allocation1 [shape = 'u32[72,128]{1,0:T(1,128)}', space=vmem, size = 0x9000, scoped, tag = 'internal scratch']
  %s0 = inlined_call_operand.vmem [shape: s32[8,4], index: 0, kind: input, shape index: {}]
  %s1 = inlined_call_operand.vmem [shape: bf16[72,128], index: 1, kind: input, shape index: {}]
  %s2 = inlined_call_operand.vmem [shape: bf16[128,64], index: 2, kind: input, shape index: {}]
  %s3 = inlined_call_operand.vmem [shape: f32[1,64], index: 3, kind: input, shape index: {}]
  %s4 = inlined_call_operand.hbm [shape: f32[8,64], index: 4, kind: output, shape index: {}]
  %s5 = sld [smem:[#allocation0]]
  $region26: #{tpu_custom_call.1} parent=0
    _
  %s7 = ssub.s32 1, %s5
  %s8 = scalar_select 0, %s7, %s5
  $region1: #{tpu_custom_call.1} parent=0
    #allocation2 [shape = 'u8[4096]{0}', space=vmem, size = 0x1000, scoped, tag = 'output window, operand 0, single buffered']
    #allocation3 [shape = 's32[1]{0}', space=sflag, size = 0x4, scoped, tag = 'scoped memory for tpu_custom_call.1']
    %9 = vsyncpa [#allocation3], 0
    // Predicated region
    $region2: #{tpu_custom_call.1} parent=1 // pred_check
      _
    $region3: #{tpu_custom_call.1} parent=1 // pred_check_branch
      %11 = sbr.rel (0) target = $region5
    $region4: #{tpu_custom_call.1} parent=1 // pred_region
      _
    $region5: #{tpu_custom_call.1} parent=1 // pred_fallthru
      _
    // Predicated region
    $region6: #{tpu_custom_call.1} parent=1 // pred_check
      _
    $region7: #{tpu_custom_call.1} parent=1 // pred_check_branch
      %13 = sbr.rel (0) target = $region9
    $region8: #{tpu_custom_call.1} parent=1 // pred_region
      _
    $region9: #{tpu_custom_call.1} parent=1 // pred_fallthru
      _
    // Predicated region
    $region10: #{tpu_custom_call.1} parent=1 // pred_check
      _
    $region11: #{tpu_custom_call.1} parent=1 // pred_check_branch
      %15 = sbr.rel (0) target = $region13
    $region12: #{tpu_custom_call.1} parent=1 // pred_region
      _
    $region13: #{tpu_custom_call.1} parent=1 // pred_fallthru
      _
    // Predicated region
    $region14: #{tpu_custom_call.1} parent=1 // pred_check
      _
    $region15: #{tpu_custom_call.1} parent=1 // pred_check_branch
      %17 = sbr.rel (0) target = $region17
    $region16: #{tpu_custom_call.1} parent=1 // pred_region
      _
    $region17: #{tpu_custom_call.1} parent=1 // pred_fallthru
      _
    %v19 = vld [vmem:[%s0] sm:$0xff]
    %v20 = vlaneseq
    %v21 = vand.u32 %v20, 127
    %22 = vset.pattern.permute.xlu0 0
    %23 = vperm.xlu0 %22, %v19
    %v24 = vpop.permute.xlu0 %23
    %vm25 = vcmp.eq.s32.totalorder %v24, %v21
    %26 = vset.pattern.permute.xlu0 1
    %27 = vperm.xlu0 %26, %v19
    %v28 = vpop.permute.xlu0 %27
    %vm29 = vcmp.eq.s32.totalorder %v28, %v21
    %vm30 = vmor %vm25, %vm29
    %31 = vset.pattern.permute.xlu0 2
    %32 = vperm.xlu0 %31, %v19
    %v33 = vpop.permute.xlu0 %32
    %vm34 = vcmp.eq.s32.totalorder %v33, %v21
    %vm35 = vmor %vm30, %vm34
    %36 = vset.pattern.permute.xlu0 3
    %37 = vperm.xlu0 %36, %v19
    %v38 = vpop.permute.xlu0 %37
    %vm39 = vcmp.eq.s32.totalorder %v38, %v21
    %vm40 = vmor %vm35, %vm39
    %v41 = vsel %vm40, 1, 0
    %v42 = vcvt.s32.f32 %v41
    %v43 = vpack.c.bf16 %v42, %v42
    %v44 = vld [vmem:[%s1] sm:$0xf]
    %v45 = vld [vmem:[%s1 + $0x4] sm:$0xf]
    %v46 = vld [vmem:[%s1 + $0x8] sm:$0xf]
    %v47 = vld [vmem:[%s1 + $0xc] sm:$0xf]
    %v48 = vld [vmem:[%s1 + $0x10] sm:$0xf]
    %v49 = vld [vmem:[%s1 + $0x14] sm:$0xf]
    %v50 = vld [vmem:[%s1 + $0x18] sm:$0xf]
    %v51 = vld [vmem:[%s1 + $0x1c] sm:$0xf]
    %v52 = vld [vmem:[%s1 + $0x20] sm:$0xf]
    %v62 = vunpack.c.l.b16 %v44
    %v63 = vunpack.c.l.b16 %v45
    %v64 = vunpack.c.l.b16 %v46
    %v65 = vunpack.c.l.b16 %v47
    %v66 = vunpack.c.l.b16 %v48
    %v67 = vunpack.c.l.b16 %v49
    %v68 = vunpack.c.l.b16 %v50
    %v69 = vunpack.c.l.b16 %v51
    %v70 = vunpack.c.l.b16 %v52
    %v71 = vpack.c.b16 %v63, %v62
    %v72 = vpack.c.b16 %v65, %v64
    %v73 = vpack.c.b16 %v67, %v66
    %v74 = vpack.c.b16 %v69, %v68
    %v75 = vpack.c.b16 %v70, %v70
    %vm80 = vcmask 588800
    %v82 = vsel %vm80, %v43, 0
    %vm84 = vcmask 1043456
    %v86 = vsel %vm84, %v75, 0
    %88 = vmatpush.bf16.msra.mxu0 0
    %89 = vmatpush.bf16.msra.mxu0 0
    %90 = vmatpush.bf16.msra.mxu0 0
    %91 = vmatpush.bf16.msra.mxu0 %v86
    %92 = vmatpush.bf16.msra.mxu0 %v74
    %93 = vmatpush.bf16.msra.mxu0 %v73
    %94 = vmatpush.bf16.msra.mxu0 %v72
    %95 = vmatpush.bf16.msra.mxu0 %v71
    %96 = vmatmul.bf16.gmra.mxu0 %v82
    %v97 = vpop.f32.mrf.mxu0
    %v98 = vadd.f32 0.0, %v97
    %v99 = vpop.f32.mrf.mxu0
    %100 = vdwg.mxu0
    %v101 = vmax.f32 %v98, 0.0
    %v102 = vpack.c.bf16 %v101, %v101
    %v103 = vld [vmem:[%s2] sm:$0xf]
    %v104 = vld [vmem:[%s2 + $0x4] sm:$0xf]
    %v105 = vld [vmem:[%s2 + $0x8] sm:$0xf]
    %v106 = vld [vmem:[%s2 + $0xc] sm:$0xf]
    %v107 = vld [vmem:[%s2 + $0x10] sm:$0xf]
    %v108 = vld [vmem:[%s2 + $0x14] sm:$0xf]
    %v109 = vld [vmem:[%s2 + $0x18] sm:$0xf]
    %v110 = vld [vmem:[%s2 + $0x1c] sm:$0xf]
    %v111 = vld [vmem:[%s2 + $0x20] sm:$0xf]
    %v112 = vld [vmem:[%s2 + $0x24] sm:$0xf]
    %v113 = vld [vmem:[%s2 + $0x28] sm:$0xf]
    %v114 = vld [vmem:[%s2 + $0x2c] sm:$0xf]
    %v115 = vld [vmem:[%s2 + $0x30] sm:$0xf]
    %v116 = vld [vmem:[%s2 + $0x34] sm:$0xf]
    %v117 = vld [vmem:[%s2 + $0x38] sm:$0xf]
    %v118 = vld [vmem:[%s2 + $0x3c] sm:$0xf]
    %v119 = vld [vmem:[%s3] sm:$0x1]
    %v121 = vperm.slane %v119, 0
    %v139 = vunpack.c.l.b16 %v103
    %v140 = vunpack.c.l.b16 %v104
    %v141 = vunpack.c.l.b16 %v105
    %v142 = vunpack.c.l.b16 %v106
    %v143 = vunpack.c.l.b16 %v107
    %v144 = vunpack.c.l.b16 %v108
    %v145 = vunpack.c.l.b16 %v109
    %v146 = vunpack.c.l.b16 %v110
    %v147 = vunpack.c.l.b16 %v111
    %v148 = vunpack.c.l.b16 %v112
    %v149 = vunpack.c.l.b16 %v113
    %v150 = vunpack.c.l.b16 %v114
    %v151 = vunpack.c.l.b16 %v115
    %v152 = vunpack.c.l.b16 %v116
    %v153 = vunpack.c.l.b16 %v117
    %v154 = vunpack.c.l.b16 %v118
    %v155 = vpack.c.b16 %v140, %v139
    %v156 = vpack.c.b16 %v142, %v141
    %v157 = vpack.c.b16 %v144, %v143
    %v158 = vpack.c.b16 %v146, %v145
    %v159 = vpack.c.b16 %v148, %v147
    %v160 = vpack.c.b16 %v150, %v149
    %v161 = vpack.c.b16 %v152, %v151
    %v162 = vpack.c.b16 %v154, %v153
    %171 = vmatpush.bf16.msra.mxu0 %v162
    %172 = vmatpush.bf16.msra.mxu0 %v161
    %173 = vmatpush.bf16.msra.mxu0 %v160
    %174 = vmatpush.bf16.msra.mxu0 %v159
    %175 = vmatpush.bf16.msra.mxu0 %v158
    %176 = vmatpush.bf16.msra.mxu0 %v157
    %177 = vmatpush.bf16.msra.mxu0 %v156
    %178 = vmatpush.bf16.msra.mxu0 %v155
    %179 = vmatmul.bf16.gmra.mxu0 %v102
    %v180 = vpop.f32.mrf.mxu0
    %v181 = vadd.f32 %v121, %v180
    %v182 = vpop.f32.mrf.mxu0
    %183 = vdwg.mxu0
    %v184 = vmax.f32 %v181, 0.0
    %vm185 = vcmask 523264
    %186 = vst.msk [vmem:[#allocation2] sm:$0xff] %vm185, %v184
    // Predicated region
    $region18: #{tpu_custom_call.1} parent=1 // pred_check
      _
    $region19: #{tpu_custom_call.1} parent=1 // pred_check_branch
      %188 = sbr.rel (0) target = $region21
    $region20: #{tpu_custom_call.1} parent=1 // pred_region
      %190 = vsyncadd [#allocation3], 0
      %s192 = sshll.u32 [#allocation2], 4
      %s193 = int_to_ptr.vmem [resolvable:$true] %s192
      %s194 = sshll.u32 %s4, 4
      %s195 = int_to_ptr.hbm [resolvable:$true] %s194
      %197 = dma.vmem_to_hbm [thread:$0]  %s193, 128, %s195, [#allocation3]
    $region21: #{tpu_custom_call.1} parent=1 // pred_fallthru
      _
    // Predicated region
    $region22: #{tpu_custom_call.1} parent=1 // pred_check
      _
    $region23: #{tpu_custom_call.1} parent=1 // pred_check_branch
      %199 = sbr.rel (0) target = $region25
    $region24: #{tpu_custom_call.1} parent=1 // pred_region
      %201 = dma.done [#allocation3], 128
    $region25: #{tpu_custom_call.1} parent=1 // pred_fallthru
      _
    %202 = vsyncpa [#allocation3], 1

</llo_original>
